<compile_context>
chip_gen: v5e
topology: v5e:2x2
jax: 0.10.0
libtpu: 0.0.40
codegen_flags: <defaults>
</compile_context>

<pallas_src>
import jax
import jax.numpy as jnp
from jax.experimental import pallas as pl
from jax.experimental.pallas import tpu as pltpu

NUM_ACTIONS = 4        # len(action_list) in the reference module
LANES = 128            # vreg lane width
MAX_BLOCK_ROWS = 2048  # 2048x128 f32 = 1 MiB per output block

TWO_PI = 6.283185307179586


def _tensorcores_per_chip() -> int:
    """2 on v7x (megacore split pays off), 1 on v5e/v6e."""
    try:
        kind = jax.devices()[0].device_kind.lower()
    except Exception:
        return 1
    return 2 if "v7" in kind else 1


def _mix_u32(x):
    """lowbias32-style integer hash on uint32 arrays (wraps mod 2**32)."""
    x = x ^ (x >> jnp.uint32(16))
    x = x * jnp.uint32(0x7FEB352D)
    x = x ^ (x >> jnp.uint32(15))
    x = x * jnp.uint32(0x846CA68B)
    x = x ^ (x >> jnp.uint32(16))
    return x


def _randn_kernel(seed_ref, o_ref):
    """Fill o_ref (a [block_rows, 128] f32 tile) with N(0,1) samples."""
    block_rows, lanes = o_ref.shape
    half = block_rows // 2  # one uniform pair produces two normals
    pid = pl.program_id(0).astype(jnp.uint32)
    seed = seed_ref[0].astype(jnp.uint32)

    # Unique counter per (z0, z1) output pair, globally across the grid.
    row = jax.lax.broadcasted_iota(jnp.uint32, (half, lanes), 0)
    col = jax.lax.broadcasted_iota(jnp.uint32, (half, lanes), 1)
    pair_idx = (pid * jnp.uint32(half) + row) * jnp.uint32(lanes) + col

    # One full mix per pair; second stream is a cheap 2-op remix of the
    # already-mixed word (stub-randn quality tradeoff, saves ~6 VALU ops/pair).
    bits1 = _mix_u32(pair_idx + seed * jnp.uint32(0x9E3779B9))
    bits2 = bits1 * jnp.uint32(0x85EBCA6B)
    bits2 = bits2 ^ (bits2 >> jnp.uint32(13))

    # Exponent bit-trick uniforms: 0x3F800000 | mantissa -> [1, 2).
    one_bits = jnp.uint32(0x3F800000)
    f1 = pltpu.bitcast(one_bits | (bits1 >> jnp.uint32(9)), jnp.float32)  # [1, 2)
    f2 = pltpu.bitcast(one_bits | (bits2 >> jnp.uint32(9)), jnp.float32)  # [1, 2)
    u1 = jnp.float32(2.0) - f1   # (0, 1]  (never 0 -> log is finite)
    u2 = f2 - jnp.float32(1.0)   # [0, 1)

    # Box-Muller, both branches, sin replaced by sign-corrected sqrt(1 - c^2).
    r = jnp.sqrt(jnp.float32(-2.0) * jnp.log(u1))
    theta = jnp.float32(TWO_PI) * u2
    c = jnp.cos(theta)
    sin_sign = jnp.where(u2 < jnp.float32(0.5), jnp.float32(1.0), jnp.float32(-1.0))
    s = sin_sign * jnp.sqrt(jnp.maximum(jnp.float32(1.0) - c * c, jnp.float32(0.0)))
    z0 = r * c
    z1 = r * s

    # Two static half-tile stores (half % 8 == 0 -> unmasked, lane-dense vst).
    o_ref[:half, :] = z0
    o_ref[half:, :] = z1


def random_generator_forward(batch_size: int, seed: int, num_actions: int = NUM_ACTIONS):
    """Equivalent of RandomGenerator(batch_size).forward(steps)."""
    total = batch_size * num_actions

    # Pack B*A elements row-major into a lane-dense (rows, 128) slab.
    # rows is a multiple of 16 so each z0/z1 half-tile is 8-sublane aligned.
    rows = max(16, ((pl.cdiv(total, LANES) + 15) // 16) * 16)

    cores = _tensorcores_per_chip()
    if rows <= MAX_BLOCK_ROWS:
        if cores >= 2 and rows >= 32:
            # v7x: split into 2 parallel blocks so both TensorCores work.
            rows = ((rows + 31) // 32) * 32
            block_rows = rows // 2
        else:
            # v5e/v6e: single block, no per-step overhead.
            block_rows = rows
    else:
        block_rows = MAX_BLOCK_ROWS
        num_blocks = (rows + block_rows - 1) // block_rows
        if cores >= 2 and num_blocks % 2 == 1:
            num_blocks += 1  # balance the two TCs
        rows = num_blocks * block_rows
    num_blocks = rows // block_rows

    seed_arr = jnp.asarray([seed], dtype=jnp.int32)

    packed = pl.pallas_call(
        _randn_kernel,
        out_shape=jax.ShapeDtypeStruct((rows, LANES), jnp.float32),
        grid=(num_blocks,),
        in_specs=[pl.BlockSpec(memory_space=pltpu.MemorySpace.SMEM)],
        out_specs=pl.BlockSpec((block_rows, LANES), lambda i: (i, 0)),
        compiler_params=pltpu.CompilerParams(
            dimension_semantics=("parallel",)),
    )(seed_arr)

    # Take exactly the B*A logical samples, present as NCHW (B, A, 1, 1).
    # (When total == rows*LANES this reshape+slice is metadata-only; otherwise
    # it is a tiny XLA copy of `total` floats.)
    action = packed.reshape(-1)[:total].reshape(batch_size, num_actions, 1, 1)
    return action


if __name__ == "__main__":
    # Deterministic setup (the module's forward is pure RNG; derive a fixed seed).
    key = jax.random.PRNGKey(0)
    seed = int(jax.random.randint(key, (), 0, 2**31 - 1, dtype=jnp.int32))

    batch_size = 2
    # `steps` is accepted but unused by the reference forward; we mirror that.
    steps = None  # TODO(synk): action_list (DGL graph mutation helpers) has no array semantics; unused by forward.

    action = random_generator_forward(batch_size, seed)
    action = jax.block_until_ready(action)

    assert action.shape == (batch_size, NUM_ACTIONS, 1, 1), action.shape
    assert action.dtype == jnp.float32
    assert bool(jnp.all(jnp.isfinite(action)))
    # Samples should not be degenerate (distinct values, nonzero spread).
    assert float(jnp.std(action)) > 0.0

    print("KERNEL_OK")
</pallas_src>

<mosaic_0001>
module attributes {stable_mosaic.version = 11 : i64} {
  func.func @_randn_kernel(%arg0: i32, %arg1: memref<1xi32, #tpu.memory_space<smem>>, %arg2: memref<16x128xf32, #tpu.memory_space<vmem>>) attributes {dimension_semantics = [#tpu.dimension_semantics<parallel>], iteration_bounds = array<i64: 1>, scalar_prefetch = 0 : i64, scratch_operands = 0 : i64, tpu.core_type = #tpu.core_type<tc>, window_params = [{transform_indices = @transform_0, window_bounds = array<i64: 1>}, {transform_indices = @transform_1, window_bounds = array<i64: 16, 128>}]} {
    %c0 = arith.constant 0 : index
    %0 = memref.load %arg1[%c0] : memref<1xi32, #tpu.memory_space<smem>>
    %1 = tpu.iota {dimensions = array<i32: 0>} : vector<8x128xi32>
    %2 = tpu.iota {dimensions = array<i32: 1>} : vector<8x128xi32>
    %c8_i32 = arith.constant 8 : i32
    %3 = arith.muli %arg0, %c8_i32 : i32
    %4 = vector.broadcast %3 : i32 to vector<8x128xi32>
    %5 = arith.addi %4, %1 : vector<8x128xi32>
    %c128_i32 = arith.constant 128 : i32
    %6 = vector.broadcast %c128_i32 : i32 to vector<8x128xi32>
    %7 = arith.muli %5, %6 : vector<8x128xi32>
    %8 = arith.addi %7, %2 : vector<8x128xi32>
    %c-1640531527_i32 = arith.constant -1640531527 : i32
    %9 = arith.muli %0, %c-1640531527_i32 : i32
    %10 = vector.broadcast %9 : i32 to vector<8x128xi32>
    %11 = arith.addi %8, %10 : vector<8x128xi32>
    %c16_i32 = arith.constant 16 : i32
    %12 = vector.broadcast %c16_i32 : i32 to vector<8x128xi32>
    %13 = arith.shrui %11, %12 : vector<8x128xi32>
    %14 = arith.xori %11, %13 : vector<8x128xi32>
    %c2146121005_i32 = arith.constant 2146121005 : i32
    %15 = vector.broadcast %c2146121005_i32 : i32 to vector<8x128xi32>
    %16 = arith.muli %14, %15 : vector<8x128xi32>
    %c15_i32 = arith.constant 15 : i32
    %17 = vector.broadcast %c15_i32 : i32 to vector<8x128xi32>
    %18 = arith.shrui %16, %17 : vector<8x128xi32>
    %19 = arith.xori %16, %18 : vector<8x128xi32>
    %c-2073254261_i32 = arith.constant -2073254261 : i32
    %20 = vector.broadcast %c-2073254261_i32 : i32 to vector<8x128xi32>
    %21 = arith.muli %19, %20 : vector<8x128xi32>
    %c16_i32_0 = arith.constant 16 : i32
    %22 = vector.broadcast %c16_i32_0 : i32 to vector<8x128xi32>
    %23 = arith.shrui %21, %22 : vector<8x128xi32>
    %24 = arith.xori %21, %23 : vector<8x128xi32>
    %c-2048144789_i32 = arith.constant -2048144789 : i32
    %25 = vector.broadcast %c-2048144789_i32 : i32 to vector<8x128xi32>
    %26 = arith.muli %24, %25 : vector<8x128xi32>
    %c13_i32 = arith.constant 13 : i32
    %27 = vector.broadcast %c13_i32 : i32 to vector<8x128xi32>
    %28 = arith.shrui %26, %27 : vector<8x128xi32>
    %29 = arith.xori %26, %28 : vector<8x128xi32>
    %c9_i32 = arith.constant 9 : i32
    %30 = vector.broadcast %c9_i32 : i32 to vector<8x128xi32>
    %31 = arith.shrui %24, %30 : vector<8x128xi32>
    %c1065353216_i32 = arith.constant 1065353216 : i32
    %32 = vector.broadcast %c1065353216_i32 : i32 to vector<8x128xi32>
    %33 = arith.ori %32, %31 : vector<8x128xi32>
    %34 = tpu.bitcast %33 : vector<8x128xi32> -> vector<8x128xf32>
    %c9_i32_1 = arith.constant 9 : i32
    %35 = vector.broadcast %c9_i32_1 : i32 to vector<8x128xi32>
    %36 = arith.shrui %29, %35 : vector<8x128xi32>
    %c1065353216_i32_2 = arith.constant 1065353216 : i32
    %37 = vector.broadcast %c1065353216_i32_2 : i32 to vector<8x128xi32>
    %38 = arith.ori %37, %36 : vector<8x128xi32>
    %39 = tpu.bitcast %38 : vector<8x128xi32> -> vector<8x128xf32>
    %cst = arith.constant 2.000000e+00 : f32
    %40 = vector.broadcast %cst : f32 to vector<8x128xf32>
    %41 = arith.subf %40, %34 : vector<8x128xf32>
    %cst_3 = arith.constant 1.000000e+00 : f32
    %42 = vector.broadcast %cst_3 : f32 to vector<8x128xf32>
    %43 = arith.subf %39, %42 : vector<8x128xf32>
    %44 = math.log %41 : vector<8x128xf32>
    %cst_4 = arith.constant -2.000000e+00 : f32
    %45 = vector.broadcast %cst_4 : f32 to vector<8x128xf32>
    %46 = arith.mulf %45, %44 : vector<8x128xf32>
    %47 = math.sqrt %46 : vector<8x128xf32>
    %cst_5 = arith.constant 6.28318548 : f32
    %48 = vector.broadcast %cst_5 : f32 to vector<8x128xf32>
    %49 = arith.mulf %48, %43 : vector<8x128xf32>
    %50 = math.cos %49 : vector<8x128xf32>
    %cst_6 = arith.constant 5.000000e-01 : f32
    %51 = vector.broadcast %cst_6 : f32 to vector<8x128xf32>
    %52 = arith.cmpf olt, %43, %51 : vector<8x128xf32>
    %cst_7 = arith.constant 1.000000e+00 : f32
    %cst_8 = arith.constant -1.000000e+00 : f32
    %53 = vector.broadcast %cst_7 : f32 to vector<8x128xf32>
    %54 = vector.broadcast %cst_8 : f32 to vector<8x128xf32>
    %55 = arith.select %52, %53, %54 : vector<8x128xi1>, vector<8x128xf32>
    %56 = arith.mulf %50, %50 : vector<8x128xf32>
    %cst_9 = arith.constant 1.000000e+00 : f32
    %57 = vector.broadcast %cst_9 : f32 to vector<8x128xf32>
    %58 = arith.subf %57, %56 : vector<8x128xf32>
    %cst_10 = arith.constant 0.000000e+00 : f32
    %59 = vector.broadcast %cst_10 : f32 to vector<8x128xf32>
    %60 = arith.maximumf %58, %59 : vector<8x128xf32>
    %61 = math.sqrt %60 : vector<8x128xf32>
    %62 = arith.mulf %55, %61 : vector<8x128xf32>
    %63 = arith.mulf %47, %50 : vector<8x128xf32>
    %64 = arith.mulf %47, %62 : vector<8x128xf32>
    %c0_11 = arith.constant 0 : index
    %c0_12 = arith.constant 0 : index
    %65 = vector.load %arg2[%c0_11, %c0_12] : memref<16x128xf32, #tpu.memory_space<vmem>>, vector<8x128xf32>
    tpu.vector_store %arg2[%c0_11, %c0_12], %63 {strides = array<i32>} : memref<16x128xf32, #tpu.memory_space<vmem>>, vector<8x128xf32>,
    %c8 = arith.constant 8 : index
    %c0_13 = arith.constant 0 : index
    %66 = vector.load %arg2[%c8, %c0_13] : memref<16x128xf32, #tpu.memory_space<vmem>>, vector<8x128xf32>
    tpu.vector_store %arg2[%c8, %c0_13], %64 {strides = array<i32>} : memref<16x128xf32, #tpu.memory_space<vmem>>, vector<8x128xf32>,
    return
  }
  func.func @transform_0(%arg0: i32) -> i32 {
    %c0_i32 = arith.constant 0 : i32
    %c0_i32_0 = arith.constant 0 : i32
    return %c0_i32 : i32
  }
  func.func @transform_1(%arg0: i32) -> (i32, i32) {
    %c0_i32 = arith.constant 0 : i32
    %c0_i32_0 = arith.constant 0 : i32
    return %arg0, %c0_i32 : i32, i32
  }
}

</mosaic_0001>

<llo_original>
// kernel: tpu_custom_call.1
$region0: #{tpu_custom_call.1}
  #allocation0 [shape = 'u32[]', space=smem, size = 0x4, offset = 0x4, fixed_abs, tag = 'smem constant byte address 0x4 - core index']
  #allocation1 [shape = 'u32[72,128]{1,0:T(1,128)}', space=vmem, size = 0x9000, scoped, tag = 'internal scratch']
  #allocation2 [shape = 's32[1]{0:T(128)S(6)}', space=smem, size = 0x200, scoped, tag = 'scoped memory for tpu_custom_call.1']
  %s0 = inlined_call_operand.<no memory space> [shape: s32[1], index: 0, kind: input, shape index: {}]
  %s1 = inlined_call_operand.hbm [shape: f32[16,128], index: 1, kind: output, shape index: {}]
  %s2 = sld [smem:[#allocation0]]
  $region14: #{tpu_custom_call.1} parent=0
    _
  %s4 = ssub.s32 1, %s2
  %s5 = scalar_select 0, %s4, %s2
  %6 = sst [smem:[#allocation2]] %s0
  $region1: #{tpu_custom_call.1} parent=0
    #allocation3 [shape = 'u8[8192]{0}', space=vmem, size = 0x2000, scoped, tag = 'output window, operand 0, single buffered']
    #allocation4 [shape = 's32[1]{0}', space=sflag, size = 0x4, scoped, tag = 'scoped memory for tpu_custom_call.1']
    %7 = vsyncpa [#allocation4], 0
    // Predicated region
    $region2: #{tpu_custom_call.1} parent=1 // pred_check
      _
    $region3: #{tpu_custom_call.1} parent=1 // pred_check_branch
      %9 = sbr.rel (0) target = $region5
    $region4: #{tpu_custom_call.1} parent=1 // pred_region
      _
    $region5: #{tpu_custom_call.1} parent=1 // pred_fallthru
      _
    %s10 = sld [smem:[#allocation2]]
    %v11 = vlaneseq
    %v12 = vshrl.u32 %v11, 7
    %v13 = vlaneseq
    %v14 = vand.u32 %v13, 127
    %s15 = smul.u32 0, 8
    %v16 = vstv %s15
    %v17 = vadd.s32 %v16, %v12
    %v18 = vmul.u32 %v17, 128
    %v19 = vadd.s32 %v18, %v14
    %s20 = smul.u32 %s10, 2654435769
    %v21 = vstv %s20
    %v22 = vadd.s32 %v19, %v21
    %v23 = vshrl.u32 %v22, 16
    %v24 = vxor.u32 %v22, %v23
    %v25 = vmul.u32 %v24, 2146121005
    %v26 = vshrl.u32 %v25, 15
    %v27 = vxor.u32 %v25, %v26
    %v28 = vmul.u32 %v27, 2221713035
    %v29 = vshrl.u32 %v28, 16
    %v30 = vxor.u32 %v28, %v29
    %v31 = vmul.u32 %v30, 2246822507
    %v32 = vshrl.u32 %v31, 13
    %v33 = vxor.u32 %v31, %v32
    %v34 = vshrl.u32 %v30, 9
    %v35 = vor.u32 %v34, 1065353216
    %v37 = vshrl.u32 %v33, 9
    %v38 = vor.u32 %v37, 1065353216
    %v40 = vsub.f32 2.0, %v35
    %v41 = vsub.f32 %v38, 1.0
    %v42 = vlog2.pop %v40
    %v43 = vmul.f32 %v42, 0.6931472
    %v44 = vmul.f32 %v43, -2.0
    %v45 = vrsqrt.pop %v44
    %v46 = vmul.f32 %v45, %v44
    %v47 = vmul.f32 %v46, %v45
    %v48 = vmul.f32 0.5, %v47
    %v49 = vsub.f32 1.5, %v48
    %v50 = vmul.f32 %v45, %v49
    %v51 = vmul.f32 %v44, %v50
    %vm52 = vcmp.eq.f32.partialorder %v44, inf
    %v53 = vsel %vm52, %v44, %v51
    %vm54 = vcmp.eq.f32.partialorder %v44, 0.0
    %v55 = vand.u32 %v44, 2147483648
    %v56 = vsel %vm54, %v55, %v53
    %v57 = vmul.f32 %v41, 6.2831855
    %v58 = vand.u32 2147483647, %v57
    %vm59 = vcmp.le.f32.partialorder %v58, 0.7853982
    %vm60 = vcmp.lt.s32.totalorder %v57, 0
    %v61 = vand.u32 %v57, 2139095040
    %v62 = vshrl.u32 %v61, 23
    %v63 = vsub.s32 %v62, 127
    %v64 = vand.u32 2147483647, %v57
    %v65 = vand.u32 %v64, 8388607
    %v66 = vor.u32 %v65, 8388608
    %v67 = vsub.s32 0, %v66
    %v68 = vadd.s32 %v63, 1
    %vm69 = vcmp.gt.s32.totalorder %v68, 0
    %v70 = vsel %vm69, %v68, 0
    %v71 = vshrl.u32 %v70, 5
    %v72 = vand.u32 %v70, 31
    %v73 = vsub.s32 32, %v72
    %v74 = vshrl.u32 683565275, %v73
    %v75 = vshll.u32 683565275, %v72
    %v76 = vshrl.u32 2475754826, %v73
    %v77 = vor.u32 %v75, %v76
    %v78 = vshll.u32 2475754826, %v72
    %v79 = vshrl.u32 2131351028, %v73
    %v80 = vor.u32 %v78, %v79
    %v81 = vshll.u32 2131351028, %v72
    %v82 = vshrl.u32 2102212464, %v73
    %v83 = vor.u32 %v81, %v82
    %v84 = vshll.u32 2102212464, %v72
    %v85 = vshrl.u32 920167782, %v73
    %v86 = vor.u32 %v84, %v85
    %v87 = vshll.u32 920167782, %v72
    %v88 = vshrl.u32 1326507024, %v73
    %v89 = vor.u32 %v87, %v88
    %vm90 = vcmp.lt.s32.totalorder %v71, 1
    %vm91 = vcmp.lt.s32.totalorder %v71, 2
    %vm92 = vcmp.lt.s32.totalorder %v71, 3
    %vm93 = vcmp.lt.s32.totalorder %v71, 4
    %v94 = vsel %vm90, %v74, %v77
    %v95 = vsel %vm93, %v83, 2102212464
    %v96 = vsel %vm92, %v80, %v95
    %v97 = vsel %vm91, %v94, %v96
    %v98 = vsel %vm90, %v77, %v80
    %v99 = vsel %vm93, %v86, 920167782
    %v100 = vsel %vm92, %v83, %v99
    %v101 = vsel %vm91, %v98, %v100
    %v102 = vsel %vm90, %v80, %v83
    %v103 = vsel %vm93, %v89, 1326507024
    %v104 = vsel %vm92, %v86, %v103
    %v105 = vsel %vm91, %v102, %v104
    %v106 = vshll.u32 %v66, 8
    %v107 = vand.u32 %v106, 65535
    %v108 = vshrl.u32 %v106, 16
    %v109 = vand.u32 %v105, 65535
    %v110 = vshrl.u32 %v105, 16
    %v111 = vmul.u32 %v107, %v109
    %v112 = vmul.u32 %v107, %v110
    %v113 = vmul.u32 %v108, %v109
    %v114 = vmul.u32 %v108, %v110
    %v115 = vshll.u32 %v112, 16
    %v116 = vshrl.u32 %v112, 16
    %v117 = vshll.u32 %v113, 16
    %v118 = vshrl.u32 %v113, 16
    %vm119 = vc.u32 %v111, %v115
    %v120 = vsel %vm119, 1, 0
    %v121 = vadd.s32 %v111, %v115
    %v122 = vadd.s32 %v114, %v120
    %vm123 = vc.u32 %v121, %v117
    %v124 = vsel %vm123, 1, 0
    %v125 = vadd.s32 %v121, %v117
    %v126 = vadd.s32 %v122, %v124
    %v127 = vadd.s32 %v126, %v116
    %v128 = vadd.s32 %v127, %v118
    %v129 = vand.u32 %v106, 65535
    %v130 = vshrl.u32 %v106, 16
    %v131 = vand.u32 %v101, 65535
    %v132 = vshrl.u32 %v101, 16
    %v133 = vmul.u32 %v129, %v131
    %v134 = vmul.u32 %v129, %v132
    %v135 = vmul.u32 %v130, %v131
    %v136 = vmul.u32 %v130, %v132
    %v137 = vshll.u32 %v134, 16
    %v138 = vshrl.u32 %v134, 16
    %v139 = vshll.u32 %v135, 16
    %v140 = vshrl.u32 %v135, 16
    %vm141 = vc.u32 %v133, %v137
    %v142 = vsel %vm141, 1, 0
    %v143 = vadd.s32 %v133, %v137
    %v144 = vadd.s32 %v136, %v142
    %vm145 = vc.u32 %v143, %v139
    %v146 = vsel %vm145, 1, 0
    %v147 = vadd.s32 %v143, %v139
    %v148 = vadd.s32 %v144, %v146
    %v149 = vadd.s32 %v148, %v138
    %v150 = vadd.s32 %v149, %v140
    %v151 = vmul.u32 %v106, %v97
    %v152 = vadd.s32 %v128, %v147
    %vm153 = vc.u32 %v128, %v147
    %v154 = vadd.s32 %v150, 1
    %v155 = vsel %vm153, %v154, %v150
    %v156 = vadd.s32 %v151, %v155
    %v157 = vadd.s32 %v156, 536870912
    %v158 = vshrl.u32 %v157, 30
    %v159 = vshll.u32 %v158, 30
    %v160 = vsub.s32 %v156, %v159
    %vm161 = vcmp.lt.s32.totalorder %v160, 0
    %v162 = vsub.s32 0, %v160
    %v163 = vsel %vm161, %v162, %v160
    %v164 = vclz %v163
    %v165 = vsub.s32 %v164, 2
    %vm166 = vcmp.gt.s32.totalorder 0, %v165
    %v167 = vsel %vm166, 0, %v165
    %v168 = vsub.s32 32, %v167
    %v169 = vshll.u32 %v160, %v167
    %v170 = vshrl.u32 %v152, %v168
    %v171 = vor.u32 %v169, %v170
    %v172 = vsub.s32 4294967266, %v167
    %v173 = vadd.s32 %v172, 127
    %v174 = vshll.u32 %v173, 23
    %v175 = vor.u32 4788187, %v174
    %v176 = vand.u32 2147483647, %v175
    %v178 = vcvt.s32.f32 %v171
    %v179 = vmul.f32 %v178, %v176
    %v180 = vxor.u32 %v179, 2147483648
    %v181 = vsel %vm60, %v180, %v179
    %v182 = vsub.s32 4, %v158
    %v183 = vsel %vm60, %v182, %v158
    %v184 = vsel %vm59, %v57, %v181
    %v185 = vsel %vm59, 0, %v183
    %v186 = vmul.f32 %v184, %v184
    %v187 = vmul.f32 %v186, -0.001358992
    %v188 = vadd.f32 %v187, 0.041655596
    %v189 = vmul.f32 %v186, %v188
    %v190 = vadd.f32 %v189, -0.4999988
    %v191 = vmul.f32 %v186, %v190
    %v192 = vadd.f32 1.0, %v191
    %v193 = vmul.f32 %v184, %v184
    %v194 = vmul.f32 %v193, -0.00019511016
    %v195 = vadd.f32 %v194, 0.008332121
    %v196 = vmul.f32 %v193, %v195
    %v197 = vadd.f32 %v196, -0.16666654
    %v198 = vmul.f32 %v193, %v197
    %v199 = vadd.f32 %v198, 1.0
    %v200 = vmul.f32 %v199, %v184
    %vm201 = vweird.f32 %v57
    %v202 = vand.u32 %v185, 3
    %vm203 = vcmp.lt.s32.totalorder %v202, 2
    %vm204 = vcmp.eq.s32.totalorder %v202, 0
    %v205 = vxor.u32 %v200, 2147483648
    %v206 = vsel %vm204, %v192, %v205
    %vm207 = vcmp.eq.s32.totalorder %v202, 2
    %v208 = vxor.u32 %v192, 2147483648
    %v209 = vsel %vm207, %v208, %v200
    %v210 = vsel %vm203, %v206, %v209
    %v211 = vsel %vm201, nan, %v210
    %vm212 = vcmp.lt.f32.partialorder %v41, 0.5
    %v213 = vsel %vm212, 1.0, -1.0
    %v214 = vmul.f32 %v211, %v211
    %v215 = vsub.f32 1.0, %v214
    %v216 = vmax.f32 %v215, 0.0
    %v217 = vrsqrt.pop %v216
    %v218 = vmul.f32 %v217, %v216
    %v219 = vmul.f32 %v218, %v217
    %v220 = vmul.f32 0.5, %v219
    %v221 = vsub.f32 1.5, %v220
    %v222 = vmul.f32 %v217, %v221
    %v223 = vmul.f32 %v216, %v222
    %vm224 = vcmp.eq.f32.partialorder %v216, inf
    %v225 = vsel %vm224, %v216, %v223
    %vm226 = vcmp.eq.f32.partialorder %v216, 0.0
    %v227 = vand.u32 %v216, 2147483648
    %v228 = vsel %vm226, %v227, %v225
    %v229 = vmul.f32 %v213, %v228
    %v230 = vmul.f32 %v56, %v211
    %v231 = vmul.f32 %v56, %v229
    %232 = vst [vmem:[#allocation3] sm:$0xff] %v230
    %233 = vst [vmem:[#allocation3 + $0x8] sm:$0xff] %v231
    // Predicated region
    $region6: #{tpu_custom_call.1} parent=1 // pred_check
      _
    $region7: #{tpu_custom_call.1} parent=1 // pred_check_branch
      %235 = sbr.rel (0) target = $region9
    $region8: #{tpu_custom_call.1} parent=1 // pred_region
      %237 = vsyncadd [#allocation4], 0
      %s238 = sshll.u32 [#allocation3], 4
      %s239 = int_to_ptr.vmem [resolvable:$true] %s238
      %s240 = sshll.u32 %s1, 4
      %s241 = int_to_ptr.hbm [resolvable:$true] %s240
      %246 = dma.vmem_to_hbm [thread:$0]  %s239, 256, %s241, [#allocation4], 128, 128, 8
    $region9: #{tpu_custom_call.1} parent=1 // pred_fallthru
      _
    // Predicated region
    $region10: #{tpu_custom_call.1} parent=1 // pred_check
      _
    $region11: #{tpu_custom_call.1} parent=1 // pred_check_branch
      %248 = sbr.rel (0) target = $region13
    $region12: #{tpu_custom_call.1} parent=1 // pred_region
      %250 = dma.done [#allocation4], 256
    $region13: #{tpu_custom_call.1} parent=1 // pred_fallthru
      _
    %251 = vsyncpa [#allocation4], 1

</llo_original>
